<compile_context>
chip_gen: v7x
topology: tpu7x:2x2x1
jax: 0.10.0
libtpu: 0.0.40
codegen_flags: <defaults>
</compile_context>

<pallas_src>
import functools

import jax
import jax.numpy as jnp
from jax import lax
from jax.experimental import pallas as pl
from jax.experimental.pallas import tpu as pltpu

_EPS = 1e-10


def _round_up(x, m):
    return ((x + m - 1) // m) * m


def _js_contrib(p, q):
    # 0.5*(KL(p||m) + KL(q||m)) = 0.5 * sum_c [ p*(log(p+eps)-log(m+eps))
    #                                         + q*(log(q+eps)-log(m+eps)) ]
    m = (p + q) * 0.5
    log_m = jnp.log(m + _EPS)
    return p * (jnp.log(p + _EPS) - log_m) + q * (jnp.log(q + _EPS) - log_m)


def _js_kernel_packed(sel_ref, p_ref, q_ref, o_ref):
    # sel_ref: (L, r) one-hot segment matrix, resident across all grid steps.
    # p_ref/q_ref: (tile_g, L) packed tiles; o_ref: (tile_g, r)
    p = p_ref[...].astype(jnp.float32)
    q = q_ref[...].astype(jnp.float32)
    contrib = _js_contrib(p, q)
    # Segmented per-row reduction on the (idle) MXU: (tile_g, L) @ (L, r).
    o_ref[...] = 0.5 * jnp.dot(contrib, sel_ref[...],
                               preferred_element_type=jnp.float32)


def _js_kernel_wide(p_ref, q_ref, o_ref):
    # Wide-C path (r == 1): plain lane reduction.
    p = p_ref[...].astype(jnp.float32)
    q = q_ref[...].astype(jnp.float32)
    contrib = _js_contrib(p, q)
    o_ref[...] = 0.5 * jnp.sum(contrib, axis=1, keepdims=True)


@jax.jit
def jensen_shannon(p, q):
    """Pallas implementation of Jensen_Shannon.forward(p, q).

    p, q: (N, C) float arrays (rows are distributions over C classes).
    Returns: (N,) float32 array.
    """
    assert p.shape == q.shape and p.ndim == 2
    N, C = p.shape

    # --- stride-C lane packing parameters ---
    r = max(1, 128 // C)          # rows packed per 128-lane group row
    L = r * C                     # packed lane width (<= 128 when r > 1)
    G = pl.cdiv(N, r)             # packed group rows
    n_pad = G * r

    def pack(x):
        if n_pad != N:
            # Only needed when N % r != 0; zero rows contribute exactly 0.
            # (When N % r == 0 the reshape below is a pure view, no HBM copy.)
            x = jnp.pad(x, ((0, n_pad - N), (0, 0)))
        return x.reshape(G, L)

    p_packed = pack(p)
    q_packed = pack(q)

    # --- VMEM-budgeted tile over group rows ---
    # Footprint per step ~ (2 inputs x 2 buffers + ~4 f32 temporaries)
    #                      * tile_g * lanes_pad * 4 bytes.
    lanes_pad = _round_up(max(L, 128), 128)
    budget_bytes = 24 * 1024 * 1024
    tile_g = budget_bytes // (32 * lanes_pad)
    tile_g = max(8, min(1024, (tile_g // 8) * 8))
    # Guarantee >= ~4 grid steps when there is enough work (v7x second TC +
    # double buffering); otherwise one full-extent block is fine.
    if G >= 32:
        tile_g = min(tile_g, max(8, _round_up(pl.cdiv(G, 4), 8)))
    if tile_g >= G:
        tile_g = G
    grid = (pl.cdiv(G, tile_g),)

    itemsize = jnp.dtype(p.dtype).itemsize
    cost = pl.CostEstimate(
        flops=int(12 * n_pad * C),
        transcendentals=int(3 * n_pad * C),
        bytes_accessed=int(2 * n_pad * C * itemsize + n_pad * 4),
    )
    compiler_params = pltpu.CompilerParams(
        dimension_semantics=("parallel",),
        vmem_limit_bytes=48 * 1024 * 1024,
    )

    if r > 1:
        # One-hot segment matrix, built once (hoisted out of the grid loop)
        # and kept resident via a constant index_map.
        lane = jnp.arange(L, dtype=jnp.int32)[:, None]
        seg = jnp.arange(r, dtype=jnp.int32)[None, :]
        sel = (lane // C == seg).astype(jnp.float32)

        out = pl.pallas_call(
            _js_kernel_packed,
            out_shape=jax.ShapeDtypeStruct((G, r), jnp.float32),
            grid=grid,
            in_specs=[
                pl.BlockSpec((L, r), lambda i: (0, 0)),        # resident
                pl.BlockSpec((tile_g, L), lambda i: (i, 0)),
                pl.BlockSpec((tile_g, L), lambda i: (i, 0)),
            ],
            out_specs=pl.BlockSpec((tile_g, r), lambda i: (i, 0)),
            compiler_params=compiler_params,
            cost_estimate=cost,
        )(sel, p_packed, q_packed)
    else:
        out = pl.pallas_call(
            _js_kernel_wide,
            out_shape=jax.ShapeDtypeStruct((G, 1), jnp.float32),
            grid=grid,
            in_specs=[
                pl.BlockSpec((tile_g, L), lambda i: (i, 0)),
                pl.BlockSpec((tile_g, L), lambda i: (i, 0)),
            ],
            out_specs=pl.BlockSpec((tile_g, 1), lambda i: (i, 0)),
            compiler_params=compiler_params,
            cost_estimate=cost,
        )(p_packed, q_packed)

    return out.reshape(G * r)[:N]


def _reference_js(p, q):
    # Pure-JAX reference mirroring the PyTorch code exactly.
    def kl(a, b):
        return jnp.sum(a * jnp.log((a + _EPS) / (b + _EPS)), axis=1)
    m = (p + q) / 2.0
    return 0.5 * kl(p, m) + 0.5 * kl(q, m)


def _check(key, N, C):
    k1, k2 = jax.random.split(key)
    p = jax.nn.softmax(jax.random.normal(k1, (N, C), dtype=jnp.float32), axis=1)
    q = jax.nn.softmax(jax.random.normal(k2, (N, C), dtype=jnp.float32), axis=1)
    out = jax.block_until_ready(jensen_shannon(p, q))
    ref = _reference_js(p, q)
    assert out.shape == (N,)
    assert jnp.allclose(out, ref, atol=1e-5, rtol=1e-4), (out, ref)


if __name__ == "__main__":
    key = jax.random.PRNGKey(0)
    ks = jax.random.split(key, 4)
    # CIFAR-10-like distributions: packed path (C=10 -> r=12), single grid step.
    _check(ks[0], N=8, C=10)
    # N % r != 0 -> exercises the row-padding path (70 -> 72 rows).
    _check(ks[1], N=70, C=10)
    # Multi-step grid (G=32 -> 4 steps), pure-reshape packing (384 % 12 == 0).
    _check(ks[2], N=384, C=10)
    # Wide-C path (C > 128 -> r == 1, plain lane reduction).
    _check(ks[3], N=16, C=200)
    print("KERNEL_OK")
</pallas_src>

<mosaic_0001>
module attributes {stable_mosaic.version = 11 : i64} {
  func.func @_js_kernel_packed(%arg0: i32, %arg1: memref<120x12xf32, #tpu.memory_space<vmem>>, %arg2: memref<1x120xf32, #tpu.memory_space<vmem>>, %arg3: memref<1x120xf32, #tpu.memory_space<vmem>>, %arg4: memref<1x12xf32, #tpu.memory_space<vmem>>) attributes {dimension_semantics = [#tpu.dimension_semantics<parallel>], iteration_bounds = array<i64: 1>, scalar_prefetch = 0 : i64, scratch_operands = 0 : i64, tpu.core_type = #tpu.core_type<tc>, window_params = [{pipeline_mode = #tpu.pipeline_mode<synchronous>, transform_indices = @transform_0, window_bounds = array<i64: 120, 12>}, {transform_indices = @transform_1, window_bounds = array<i64: 1, 120>}, {transform_indices = @transform_2, window_bounds = array<i64: 1, 120>}, {transform_indices = @transform_3, window_bounds = array<i64: 1, 12>}]} {
    %c0 = arith.constant 0 : index
    %c0_0 = arith.constant 0 : index
    %0 = vector.load %arg2[%c0, %c0_0] : memref<1x120xf32, #tpu.memory_space<vmem>>, vector<1x120xf32>
    %c0_1 = arith.constant 0 : index
    %c0_2 = arith.constant 0 : index
    %1 = vector.load %arg3[%c0_1, %c0_2] : memref<1x120xf32, #tpu.memory_space<vmem>>, vector<1x120xf32>
    %2 = arith.addf %0, %1 : vector<1x120xf32>
    %cst = arith.constant 5.000000e-01 : f32
    %3 = vector.broadcast %cst : f32 to vector<1x120xf32>
    %4 = arith.mulf %2, %3 : vector<1x120xf32>
    %cst_3 = arith.constant 1.000000e-10 : f32
    %5 = vector.broadcast %cst_3 : f32 to vector<1x120xf32>
    %6 = arith.addf %4, %5 : vector<1x120xf32>
    %7 = math.log %6 : vector<1x120xf32>
    %cst_4 = arith.constant 1.000000e-10 : f32
    %8 = vector.broadcast %cst_4 : f32 to vector<1x120xf32>
    %9 = arith.addf %0, %8 : vector<1x120xf32>
    %10 = math.log %9 : vector<1x120xf32>
    %11 = arith.subf %10, %7 : vector<1x120xf32>
    %12 = arith.mulf %0, %11 : vector<1x120xf32>
    %cst_5 = arith.constant 1.000000e-10 : f32
    %13 = vector.broadcast %cst_5 : f32 to vector<1x120xf32>
    %14 = arith.addf %1, %13 : vector<1x120xf32>
    %15 = math.log %14 : vector<1x120xf32>
    %16 = arith.subf %15, %7 : vector<1x120xf32>
    %17 = arith.mulf %1, %16 : vector<1x120xf32>
    %18 = arith.addf %12, %17 : vector<1x120xf32>
    %c0_6 = arith.constant 0 : index
    %c0_7 = arith.constant 0 : index
    %19 = vector.load %arg1[%c0_6, %c0_7] : memref<120x12xf32, #tpu.memory_space<vmem>>, vector<120x12xf32>
    %cst_8 = arith.constant dense<0.000000e+00> : vector<1x12xf32>
    %20 = tpu.matmul %18, %19, %cst_8 {dimension_numbers = #tpu.dot_dimension_numbers<[1], [0], [0], [1], [0, 0, 1, 1], [], []>} : vector<1x120xf32>, vector<120x12xf32>, vector<1x12xf32> -> vector<1x12xf32>
    %cst_9 = arith.constant 5.000000e-01 : f32
    %21 = vector.broadcast %cst_9 : f32 to vector<1x12xf32>
    %22 = arith.mulf %21, %20 : vector<1x12xf32>
    %c0_10 = arith.constant 0 : index
    %c0_11 = arith.constant 0 : index
    %23 = vector.load %arg4[%c0_10, %c0_11] : memref<1x12xf32, #tpu.memory_space<vmem>>, vector<1x12xf32>
    tpu.vector_store %arg4[%c0_10, %c0_11], %22 {strides = array<i32>} : memref<1x12xf32, #tpu.memory_space<vmem>>, vector<1x12xf32>,
    return
  }
  func.func @transform_0(%arg0: i32) -> (i32, i32) {
    %c0_i32 = arith.constant 0 : i32
    %c0_i32_0 = arith.constant 0 : i32
    %c0_i32_1 = arith.constant 0 : i32
    return %c0_i32, %c0_i32_0 : i32, i32
  }
  func.func @transform_1(%arg0: i32) -> (i32, i32) {
    %c0_i32 = arith.constant 0 : i32
    %c0_i32_0 = arith.constant 0 : i32
    return %arg0, %c0_i32 : i32, i32
  }
  func.func @transform_2(%arg0: i32) -> (i32, i32) {
    %c0_i32 = arith.constant 0 : i32
    %c0_i32_0 = arith.constant 0 : i32
    return %arg0, %c0_i32 : i32, i32
  }
  func.func @transform_3(%arg0: i32) -> (i32, i32) {
    %c0_i32 = arith.constant 0 : i32
    %c0_i32_0 = arith.constant 0 : i32
    return %arg0, %c0_i32 : i32, i32
  }
}

</mosaic_0001>

<llo_original>
// kernel: jensen_shannon.1
$region0: #{jensen_shannon.1}
  #allocation0 [shape = 'u32[]', space=smem, size = 0x4, offset = 0x4, fixed_abs, tag = 'smem constant byte address 0x4 - core index']
  #allocation1 [shape = 'u32[144,128]{1,0:T(1,128)}', space=vmem, size = 0x12000, scoped, tag = 'internal scratch']
  %s0 = inlined_call_operand.vmem [shape: f32[120,12], index: 0, kind: input, shape index: {}]
  %s1 = inlined_call_operand.vmem [shape: f32[1,120], index: 1, kind: input, shape index: {}]
  %s2 = inlined_call_operand.vmem [shape: f32[1,120], index: 2, kind: input, shape index: {}]
  %s3 = inlined_call_operand.vmem [shape: f32[1,12], index: 3, kind: output, shape index: {}]
  %s4 = sld [smem:[#allocation0]]
  $region22: #{jensen_shannon.1} parent=0
    _
  %s6 = ssub.s32 1, %s4
  %s7 = scalar_select 0, %s6, %s4
  // Predicated region
  $region2: #{jensen_shannon.1} parent=0 // pred_check
    _
  $region3: #{jensen_shannon.1} parent=0 // pred_check_branch
    %9 = sbr.rel (0) target = $region5
  $region4: #{jensen_shannon.1} parent=0 // pred_region
    _
  $region5: #{jensen_shannon.1} parent=0 // pred_fallthru
    _
  // Predicated region
  $region6: #{jensen_shannon.1} parent=0 // pred_check
    _
  $region7: #{jensen_shannon.1} parent=0 // pred_check_branch
    %11 = sbr.rel (0) target = $region9
  $region8: #{jensen_shannon.1} parent=0 // pred_region
    _
  $region9: #{jensen_shannon.1} parent=0 // pred_fallthru
    _
  // Predicated region
  $region10: #{jensen_shannon.1} parent=0 // pred_check
    _
  $region11: #{jensen_shannon.1} parent=0 // pred_check_branch
    %13 = sbr.rel (0) target = $region13
  $region12: #{jensen_shannon.1} parent=0 // pred_region
    _
  $region13: #{jensen_shannon.1} parent=0 // pred_fallthru
    _
  %v14 = vld [vmem:[%s1] sm:$0x1]
  %v15 = vld [vmem:[%s2] sm:$0x1]
  %v16 = vadd.f32 %v14, %v15
  %v17 = vmul.f32 %v16, 0.5
  %v18 = vadd.f32 %v17, 1e-10
  %v19 = vlog2.pop %v18
  %v20 = vmul.f32 %v19, 0.6931472
  %v21 = vadd.f32 %v14, 1e-10
  %v22 = vlog2.pop %v21
  %v23 = vmul.f32 %v22, 0.6931472
  %v24 = vsub.f32 %v23, %v20
  %v25 = vmul.f32 %v14, %v24
  %v26 = vadd.f32 %v15, 1e-10
  %v27 = vlog2.pop %v26
  %v28 = vmul.f32 %v27, 0.6931472
  %v29 = vsub.f32 %v28, %v20
  %v30 = vmul.f32 %v15, %v29
  %v31 = vadd.f32 %v25, %v30
  %v32 = vld [vmem:[%s0] sm:$0xff]
  %v33 = vld [vmem:[%s0 + $0x8] sm:$0xff]
  %v34 = vld [vmem:[%s0 + $0x10] sm:$0xff]
  %v35 = vld [vmem:[%s0 + $0x18] sm:$0xff]
  %v36 = vld [vmem:[%s0 + $0x20] sm:$0xff]
  %v37 = vld [vmem:[%s0 + $0x28] sm:$0xff]
  %v38 = vld [vmem:[%s0 + $0x30] sm:$0xff]
  %v39 = vld [vmem:[%s0 + $0x38] sm:$0xff]
  %v40 = vld [vmem:[%s0 + $0x40] sm:$0xff]
  %v41 = vld [vmem:[%s0 + $0x48] sm:$0xff]
  %v42 = vld [vmem:[%s0 + $0x50] sm:$0xff]
  %v43 = vld [vmem:[%s0 + $0x58] sm:$0xff]
  %v44 = vld [vmem:[%s0 + $0x60] sm:$0xff]
  %v45 = vld [vmem:[%s0 + $0x68] sm:$0xff]
  %v46 = vld [vmem:[%s0 + $0x70] sm:$0xff]
  %vm47 = vcmask 982016
  %v49 = vsel %vm47, %v31, 0
  %51 = vmatprep.subr.mxu0 0.0
  %52 = vmatpush1.msra.mxu0 %v32
  %53 = vmatprep.subr.mxu0 0.0
  %54 = vmatpush1.msra.mxu0 %v33
  %55 = vmatprep.subr.mxu0 0.0
  %56 = vmatpush1.msra.mxu0 %v34
  %57 = vmatprep.subr.mxu0 0.0
  %58 = vmatpush1.msra.mxu0 %v35
  %59 = vmatprep.subr.mxu0 0.0
  %60 = vmatpush1.msra.mxu0 %v36
  %61 = vmatprep.subr.mxu0 0.0
  %62 = vmatpush1.msra.mxu0 %v37
  %63 = vmatprep.subr.mxu0 0.0
  %64 = vmatpush1.msra.mxu0 %v38
  %65 = vmatprep.subr.mxu0 0.0
  %66 = vmatpush1.msra.mxu0 %v39
  %67 = vmatprep.subr.mxu0 0.0
  %68 = vmatpush1.msra.mxu0 %v40
  %69 = vmatprep.subr.mxu0 0.0
  %70 = vmatpush1.msra.mxu0 %v41
  %71 = vmatprep.subr.mxu0 0.0
  %72 = vmatpush1.msra.mxu0 %v42
  %73 = vmatprep.subr.mxu0 0.0
  %74 = vmatpush1.msra.mxu0 %v43
  %75 = vmatprep.subr.mxu0 0.0
  %76 = vmatpush1.msra.mxu0 %v44
  %77 = vmatprep.subr.mxu0 0.0
  %78 = vmatpush1.msra.mxu0 %v45
  %79 = vmatprep.subr.mxu0 0.0
  %80 = vmatpush1.msra.mxu0 %v46
  %81 = vmatprep.subr.mxu0 0.0
  %82 = vmatpush1.msra.mxu0 0.0
  %83 = vmatprep.subr.mxu0 0.0
  %84 = vmatpush1.msra.mxu0 0.0
  %85 = vmatprep.subr.mxu0 0.0
  %86 = vmatpush1.msra.mxu0 0.0
  %87 = vmatprep.subr.mxu0 0.0
  %88 = vmatpush1.msra.mxu0 0.0
  %89 = vmatprep.subr.mxu0 0.0
  %90 = vmatpush1.msra.mxu0 0.0
  %91 = vmatprep.subr.mxu0 0.0
  %92 = vmatpush1.msra.mxu0 0.0
  %93 = vmatprep.subr.mxu0 0.0
  %94 = vmatpush1.msra.mxu0 0.0
  %95 = vmatprep.subr.mxu0 0.0
  %96 = vmatpush1.msra.mxu0 0.0
  %97 = vmatprep.subr.mxu0 0.0
  %98 = vmatpush1.msra.mxu0 0.0
  %99 = vmatprep.subr.mxu0 0.0
  %100 = vmatpush1.msra.mxu0 0.0
  %101 = vmatprep.subr.mxu0 0.0
  %102 = vmatpush1.msra.mxu0 0.0
  %103 = vmatprep.subr.mxu0 0.0
  %104 = vmatpush1.msra.mxu0 0.0
  %105 = vmatprep.subr.mxu0 0.0
  %106 = vmatpush1.msra.mxu0 0.0
  %107 = vmatprep.subr.mxu0 0.0
  %108 = vmatpush1.msra.mxu0 0.0
  %109 = vmatprep.subr.mxu0 0.0
  %110 = vmatpush1.msra.mxu0 0.0
  %111 = vmatprep.subr.mxu0 0.0
  %112 = vmatpush1.msra.mxu0 0.0
  %113 = vmatprep.subr.mxu0 0.0
  %114 = vmatpush1.msra.mxu0 0.0
  %115 = vmatprep.mubr.f32.mxu0 0.0
  %116 = vmatmul.mubr.f32.gmra.mrb[0].mxu0 %v49
  %v117 = vpop.f32.mrb[0].mxu0
  %v118 = vadd.f32 0.0, %v117
  %v119 = vpop.f32.mrb[0].mxu0
  %120 = vdwg.mxu0
  %v121 = vmul.f32 %v118, 0.5
  %vm122 = vcmask 90112
  %123 = vst.msk [vmem:[%s3] sm:$0x1] %vm122, %v121
  // Predicated region
  $region14: #{jensen_shannon.1} parent=0 // pred_check
    _
  $region15: #{jensen_shannon.1} parent=0 // pred_check_branch
    %125 = sbr.rel (0) target = $region17
  $region16: #{jensen_shannon.1} parent=0 // pred_region
    _
  $region17: #{jensen_shannon.1} parent=0 // pred_fallthru
    _
  // Predicated region
  $region18: #{jensen_shannon.1} parent=0 // pred_check
    _
  $region19: #{jensen_shannon.1} parent=0 // pred_check_branch
    %127 = sbr.rel (0) target = $region21
  $region20: #{jensen_shannon.1} parent=0 // pred_region
    _
  $region21: #{jensen_shannon.1} parent=0 // pred_fallthru
    _

</llo_original>
